<compile_context>
chip_gen: v6e
topology: v6e:2x2x1
jax: 0.10.0
libtpu: 0.0.40
codegen_flags: <defaults>
</compile_context>

<pallas_src>
import functools
import math

import jax
import jax.numpy as jnp
from jax.experimental import pallas as pl
from jax.experimental.pallas import tpu as pltpu


def _round_up(x, n):
    return ((x + n - 1) // n) * n


def _vmem_limit_bytes():
    """Generation-aware VMEM budget with headroom for Mosaic scratch."""
    try:
        cap = pltpu.get_tpu_info().vmem_capacity_bytes
    except Exception:  # not queryable: conservative value that fits v7x's 64 MiB
        return 48 * 1024 * 1024
    # ~75% of physical: ~48 MiB on v7x (64 MiB), ~96 MiB on v5e/v6e (128 MiB).
    return min(int(cap * 3 // 4), 100 * 1024 * 1024)


def _choose_row_tile(N, block_rows):
    """Pick TM in {256..8} minimizing padded rows + per-step overhead, and
    prefer >= 2 grid steps so v7x megacore can use both TensorCores."""
    best_tm, best_npad, best_cost = 8, _round_up(N, 8), None
    for tm in (256, 128, 64, 32, 16, 8):
        if tm > max(block_rows, 8):
            continue
        n_pad = _round_up(N, tm)
        steps = n_pad // tm
        # wasted padded rows + ~8 rows worth of fixed per-step overhead
        # + penalty when only one TensorCore would be used.
        cost = (n_pad - N) + 8 * steps + (64 if steps < 2 else 0)
        if best_cost is None or cost < best_cost:
            best_tm, best_npad, best_cost = tm, n_pad, cost
    return best_tm, best_npad


def _norm_rows(x_ref):
    # Row-normalize the feature tile in f32 (rsqrt: no sqrt + divide).
    x = x_ref[...].astype(jnp.float32)
    sum_sq = jnp.sum(x * x, axis=1, keepdims=True)
    inv_norm = jax.lax.rsqrt(jnp.maximum(sum_sq, 1e-24))  # == 1/max(||x||,1e-12)
    return (x * inv_norm).astype(x_ref.dtype)


def _sin_acos(cos):
    # sqrt(1 - c^2) for |c| <= 0.1 (guaranteed by the /10): Taylor in c^2,
    # error < 1e-7; runs on the VPU instead of the single EUP slot.
    c2 = cos * cos
    return 1.0 - c2 * (0.5 + 0.125 * c2)


def arc_kernel_single(x_ref, w_ref, o_ref, *, cos_m, sin_m, s, pad_cols):
    """Whole (padded) class dim in one block; one pass per row tile."""
    xn = _norm_rows(x_ref)
    # W already column-normalized in the wrapper; keep native dtype into the
    # MXU, accumulate in f32.
    cos = jnp.dot(xn, w_ref[...], preferred_element_type=jnp.float32) * 0.1

    e = jnp.exp(s * cos)  # exp(s * cos(a))
    # Padded W columns are exactly zero -> cos=0 -> e=1 there: constant fixup.
    down2 = (jnp.sum(e, axis=1, keepdims=True) - float(pad_cols)) - e

    s_cos_am = (s * cos_m) * cos - (s * sin_m) * _sin_acos(cos)  # s*cos(a+m)
    # log(top/(top+down2)) == s_cos_am - log(exp(s_cos_am) + down2)  (no divide)
    o_ref[...] = (s_cos_am - jnp.log(jnp.exp(s_cos_am) + down2)).astype(o_ref.dtype)


def arc_kernel_tiled(x_ref, w_ref, o_ref, rsum_ref, *, cos_m, sin_m, s, pad_cols):
    """Class-tiled two-pass kernel: grid = (row_tiles, 2, c_tiles).
    pass 0 accumulates the exp(s*cos) row-sum; pass 1 emits the output."""
    p = pl.program_id(1)
    j = pl.program_id(2)

    xn = _norm_rows(x_ref)
    cos = jnp.dot(xn, w_ref[...], preferred_element_type=jnp.float32) * 0.1
    e = jnp.exp(s * cos)

    @pl.when((p == 0) & (j == 0))
    def _():
        # Start at -pad_cols: each zero-padded W column contributes exp(0)=1.
        rsum_ref[...] = jnp.full(rsum_ref.shape, -float(pad_cols), rsum_ref.dtype)

    @pl.when(p == 0)
    def _():
        rsum_ref[...] += jnp.sum(e, axis=1, keepdims=True)

    @pl.when(p == 1)
    def _():
        s_cos_am = (s * cos_m) * cos - (s * sin_m) * _sin_acos(cos)
        down2 = rsum_ref[...] - e
        o_ref[...] = (s_cos_am - jnp.log(jnp.exp(s_cos_am) + down2)).astype(o_ref.dtype)


def arc_forward(feature, W, m=1.0, s=10.0, *, block_rows=256, block_cols=2048,
                out_dtype=jnp.float32):
    N, D = feature.shape
    D2, C = W.shape
    assert D == D2

    # F.normalize(W, dim=0) hoisted out of the kernel (one XLA op, done once).
    w32 = W.astype(jnp.float32)
    wn = (w32 / jnp.maximum(jnp.linalg.norm(w32, axis=0, keepdims=True), 1e-12)
          ).astype(W.dtype)

    TM, N_pad = _choose_row_tile(N, block_rows)
    vmem_limit = _vmem_limit_bytes()

    isz_x = jnp.dtype(feature.dtype).itemsize
    isz_w = jnp.dtype(W.dtype).itemsize
    isz_o = jnp.dtype(out_dtype).itemsize

    def vmem_estimate(c_blk):
        # x + W + out double buffers plus ~6 live (TM, c_blk) f32 temporaries.
        return (2 * TM * D * isz_x + 2 * D * c_blk * isz_w
                + 2 * TM * c_blk * isz_o + 6 * TM * c_blk * 4)

    C_pad = _round_up(C, 128)  # lane-dense (unmasked) output stores
    use_single = (C_pad <= block_cols
                  and vmem_estimate(C_pad) <= int(0.6 * vmem_limit))
    if use_single:
        TC = C_pad
    else:
        TC = 128
        for cand in (2048, 1024, 512, 256, 128):
            if cand <= block_cols and vmem_estimate(cand) <= int(0.6 * vmem_limit):
                TC = cand
                break
        C_pad = _round_up(C, TC)

    if C_pad != C:
        wn = jnp.pad(wn, ((0, 0), (0, C_pad - C)))  # zeros -> cos=0, exp=1
    x = feature if N_pad == N else jnp.pad(feature, ((0, N_pad - N), (0, 0)))

    common = dict(cos_m=math.cos(m), sin_m=math.sin(m), s=float(s),
                  pad_cols=C_pad - C)
    cparams = pltpu.CompilerParams(
        dimension_semantics=(("parallel",) if use_single
                             else ("parallel", "arbitrary", "arbitrary")),
        vmem_limit_bytes=vmem_limit,
    )

    if use_single:
        out = pl.pallas_call(
            functools.partial(arc_kernel_single, **common),
            out_shape=jax.ShapeDtypeStruct((N_pad, C_pad), out_dtype),
            grid=(N_pad // TM,),
            in_specs=[
                # x: tiled over the batch (parallel) axis.
                pl.BlockSpec((TM, D), lambda i: (i, 0)),
                # normalized W: constant block index -> fetched once, VMEM-resident.
                pl.BlockSpec((D, C_pad), lambda i: (0, 0)),
            ],
            out_specs=pl.BlockSpec((TM, C_pad), lambda i: (i, 0)),
            compiler_params=cparams,
            cost_estimate=pl.CostEstimate(
                flops=2 * N_pad * D * C_pad,
                transcendentals=3 * N_pad * C_pad,
                bytes_accessed=int(x.size * isz_x + wn.size * isz_w
                                   + N_pad * C_pad * isz_o),
            ),
        )(x, wn)
    else:
        # Two passes over the class axis per row tile.  The output index_map
        # sends every pass-0 step to block (i, 0), so no partial/garbage output
        # blocks are ever written back to HBM; pass 1 writes each block once.
        out = pl.pallas_call(
            functools.partial(arc_kernel_tiled, **common),
            out_shape=jax.ShapeDtypeStruct((N_pad, C_pad), out_dtype),
            grid=(N_pad // TM, 2, C_pad // TC),
            in_specs=[
                pl.BlockSpec((TM, D), lambda i, p, j: (i, 0)),
                pl.BlockSpec((D, TC), lambda i, p, j: (0, j)),
            ],
            out_specs=pl.BlockSpec((TM, TC), lambda i, p, j: (i, j * p)),
            scratch_shapes=[pltpu.VMEM((TM, 1), jnp.float32)],
            compiler_params=cparams,
            cost_estimate=pl.CostEstimate(
                flops=4 * N_pad * D * C_pad,      # matmul recomputed per pass
                transcendentals=4 * N_pad * C_pad,
                bytes_accessed=int(x.size * isz_x
                                   + 2 * (N_pad // TM) * wn.size * isz_w
                                   + N_pad * C_pad * isz_o),
            ),
        )(x, wn)

    # NOTE: when padding happened this slice is an extra XLA copy; callers that
    # can consume the padded (N_pad, C_pad) layout should skip it.
    if N_pad != N or C_pad != C:
        out = out[:N, :C]
    return out


def arc_reference(feature, W, m=1.0, s=10.0):
    # Pure-JAX reference matching the PyTorch forward exactly.
    xn = feature / jnp.maximum(jnp.linalg.norm(feature, axis=1, keepdims=True), 1e-12)
    wn = W / jnp.maximum(jnp.linalg.norm(W, axis=0, keepdims=True), 1e-12)
    cos = (xn @ wn) / 10.0
    a = jnp.arccos(cos)
    e = jnp.exp(s * jnp.cos(a))
    top = jnp.exp(s * jnp.cos(a + m))
    down2 = jnp.sum(e, axis=1, keepdims=True) - e
    return jnp.log(top / (top + down2))


if __name__ == "__main__":
    key = jax.random.PRNGKey(0)
    k_feat, k_w, k_feat2, k_w2 = jax.random.split(key, 4)

    # Module defaults: feature_dim=2, cls_dim=10.
    batch, feature_dim, cls_dim = 8, 2, 10
    feature = jax.random.normal(k_feat, (batch, feature_dim), dtype=jnp.float32)
    W = jax.random.normal(k_w, (feature_dim, cls_dim), dtype=jnp.float32)

    out = jax.block_until_ready(arc_forward(feature, W, m=1.0, s=10.0))
    ref = arc_reference(feature, W, m=1.0, s=10.0)
    assert out.shape == (batch, cls_dim)
    assert jnp.allclose(out, ref, atol=1e-4, rtol=1e-4), (
        f"single-pass max abs err {jnp.max(jnp.abs(out - ref))}")

    # Also exercise the class-tiled (two-pass) path with a tiny forced C tile.
    feature2 = jax.random.normal(k_feat2, (16, feature_dim), dtype=jnp.float32)
    W2 = jax.random.normal(k_w2, (feature_dim, 300), dtype=jnp.float32)
    out2 = jax.block_until_ready(
        arc_forward(feature2, W2, m=1.0, s=10.0, block_cols=128))
    ref2 = arc_reference(feature2, W2, m=1.0, s=10.0)
    assert out2.shape == (16, 300)
    assert jnp.allclose(out2, ref2, atol=1e-4, rtol=1e-4), (
        f"tiled max abs err {jnp.max(jnp.abs(out2 - ref2))}")

    print("KERNEL_OK")
</pallas_src>

<mosaic_0001>
module attributes {stable_mosaic.version = 11 : i64} {
  func.func @arc_kernel_single(%arg0: i32, %arg1: memref<8x2xf32, #tpu.memory_space<vmem>>, %arg2: memref<2x128xf32, #tpu.memory_space<vmem>>, %arg3: memref<8x128xf32, #tpu.memory_space<vmem>>) attributes {dimension_semantics = [#tpu.dimension_semantics<parallel>], iteration_bounds = array<i64: 1>, scalar_prefetch = 0 : i64, scratch_operands = 0 : i64, tpu.core_type = #tpu.core_type<tc>, window_params = [{transform_indices = @transform_0, window_bounds = array<i64: 8, 2>}, {pipeline_mode = #tpu.pipeline_mode<synchronous>, transform_indices = @transform_1, window_bounds = array<i64: 2, 128>}, {transform_indices = @transform_2, window_bounds = array<i64: 8, 128>}]} {
    %c0 = arith.constant 0 : index
    %c0_0 = arith.constant 0 : index
    %0 = vector.load %arg1[%c0, %c0_0] : memref<8x2xf32, #tpu.memory_space<vmem>>, vector<8x2xf32>
    %1 = arith.mulf %0, %0 : vector<8x2xf32>
    %cst = arith.constant dense<0.000000e+00> : vector<8xf32>
    %2 = vector.multi_reduction <add>, %1, %cst [1] : vector<8x2xf32> to vector<8xf32>
    %3 = vector.shape_cast %2 : vector<8xf32> to vector<8x1xf32>
    %cst_1 = arith.constant 1.000000e-24 : f32
    %4 = vector.broadcast %cst_1 : f32 to vector<8x1xf32>
    %5 = arith.maximumf %3, %4 : vector<8x1xf32>
    %6 = math.rsqrt %5 : vector<8x1xf32>
    %7 = vector.broadcast %6 : vector<8x1xf32> to vector<8x2xf32>
    %8 = arith.mulf %0, %7 : vector<8x2xf32>
    %c0_2 = arith.constant 0 : index
    %c0_3 = arith.constant 0 : index
    %9 = vector.load %arg2[%c0_2, %c0_3] : memref<2x128xf32, #tpu.memory_space<vmem>>, vector<2x128xf32>
    %cst_4 = arith.constant dense<0.000000e+00> : vector<8x128xf32>
    %10 = tpu.matmul %8, %9, %cst_4 {dimension_numbers = #tpu.dot_dimension_numbers<[1], [0], [0], [1], [0, 0, 1, 1], [], []>} : vector<8x2xf32>, vector<2x128xf32>, vector<8x128xf32> -> vector<8x128xf32>
    %cst_5 = arith.constant 1.000000e-01 : f32
    %11 = vector.broadcast %cst_5 : f32 to vector<8x128xf32>
    %12 = arith.mulf %10, %11 : vector<8x128xf32>
    %cst_6 = arith.constant 1.000000e+01 : f32
    %13 = vector.broadcast %cst_6 : f32 to vector<8x128xf32>
    %14 = arith.mulf %13, %12 : vector<8x128xf32>
    %15 = math.exp %14 : vector<8x128xf32>
    %cst_7 = arith.constant dense<0.000000e+00> : vector<8xf32>
    %16 = vector.multi_reduction <add>, %15, %cst_7 [1] : vector<8x128xf32> to vector<8xf32>
    %17 = vector.shape_cast %16 : vector<8xf32> to vector<8x1xf32>
    %cst_8 = arith.constant 1.180000e+02 : f32
    %18 = vector.broadcast %cst_8 : f32 to vector<8x1xf32>
    %19 = arith.subf %17, %18 : vector<8x1xf32>
    %20 = vector.broadcast %19 : vector<8x1xf32> to vector<8x128xf32>
    %21 = arith.subf %20, %15 : vector<8x128xf32>
    %cst_9 = arith.constant 5.40302324 : f32
    %22 = vector.broadcast %cst_9 : f32 to vector<8x128xf32>
    %23 = arith.mulf %22, %12 : vector<8x128xf32>
    %24 = arith.mulf %12, %12 : vector<8x128xf32>
    %cst_10 = arith.constant 1.250000e-01 : f32
    %25 = vector.broadcast %cst_10 : f32 to vector<8x128xf32>
    %26 = arith.mulf %25, %24 : vector<8x128xf32>
    %cst_11 = arith.constant 5.000000e-01 : f32
    %27 = vector.broadcast %cst_11 : f32 to vector<8x128xf32>
    %28 = arith.addf %27, %26 : vector<8x128xf32>
    %29 = arith.mulf %24, %28 : vector<8x128xf32>
    %cst_12 = arith.constant 1.000000e+00 : f32
    %30 = vector.broadcast %cst_12 : f32 to vector<8x128xf32>
    %31 = arith.subf %30, %29 : vector<8x128xf32>
    %cst_13 = arith.constant 8.414710e+00 : f32
    %32 = vector.broadcast %cst_13 : f32 to vector<8x128xf32>
    %33 = arith.mulf %32, %31 : vector<8x128xf32>
    %34 = arith.subf %23, %33 : vector<8x128xf32>
    %35 = math.exp %34 : vector<8x128xf32>
    %36 = arith.addf %35, %21 : vector<8x128xf32>
    %37 = math.log %36 : vector<8x128xf32>
    %38 = arith.subf %34, %37 : vector<8x128xf32>
    %c0_14 = arith.constant 0 : index
    %c0_15 = arith.constant 0 : index
    %39 = vector.load %arg3[%c0_14, %c0_15] : memref<8x128xf32, #tpu.memory_space<vmem>>, vector<8x128xf32>
    tpu.vector_store %arg3[%c0_14, %c0_15], %38 {strides = array<i32>} : memref<8x128xf32, #tpu.memory_space<vmem>>, vector<8x128xf32>,
    return
  }
  func.func @transform_0(%arg0: i32) -> (i32, i32) {
    %c0_i32 = arith.constant 0 : i32
    %c0_i32_0 = arith.constant 0 : i32
    return %arg0, %c0_i32 : i32, i32
  }
  func.func @transform_1(%arg0: i32) -> (i32, i32) {
    %c0_i32 = arith.constant 0 : i32
    %c0_i32_0 = arith.constant 0 : i32
    %c0_i32_1 = arith.constant 0 : i32
    return %c0_i32, %c0_i32_0 : i32, i32
  }
  func.func @transform_2(%arg0: i32) -> (i32, i32) {
    %c0_i32 = arith.constant 0 : i32
    %c0_i32_0 = arith.constant 0 : i32
    return %arg0, %c0_i32 : i32, i32
  }
}

</mosaic_0001>

<llo_original>
// kernel: tpu_custom_call.1
$region0: #{tpu_custom_call.1}
  #allocation0 [shape = 'u32[]', space=smem, size = 0x4, offset = 0x4, fixed_abs, tag = 'smem constant byte address 0x4 - core index']
  #allocation1 [shape = 'u32[144,128]{1,0:T(1,128)}', space=vmem, size = 0x12000, scoped, tag = 'internal scratch']
  %s0 = inlined_call_operand.vmem [shape: f32[8,2], index: 0, kind: input, shape index: {}]
  %s1 = inlined_call_operand.vmem [shape: f32[2,128], index: 1, kind: input, shape index: {}]
  %s2 = inlined_call_operand.hbm [shape: f32[8,128], index: 2, kind: output, shape index: {}]
  %s3 = sld [smem:[#allocation0]]
  $region18: #{tpu_custom_call.1} parent=0
    _
  %s5 = ssub.s32 1, %s3
  %s6 = scalar_select 0, %s5, %s3
  $region1: #{tpu_custom_call.1} parent=0
    #allocation2 [shape = 'u8[4096]{0}', space=vmem, size = 0x1000, scoped, tag = 'output window, operand 0, single buffered']
    #allocation3 [shape = 's32[1]{0}', space=sflag, size = 0x4, scoped, tag = 'scoped memory for tpu_custom_call.1']
    %7 = vsyncpa [#allocation3], 0
    // Predicated region
    $region2: #{tpu_custom_call.1} parent=1 // pred_check
      _
    $region3: #{tpu_custom_call.1} parent=1 // pred_check_branch
      %9 = sbr.rel (0) target = $region5
    $region4: #{tpu_custom_call.1} parent=1 // pred_region
      _
    $region5: #{tpu_custom_call.1} parent=1 // pred_fallthru
      _
    // Predicated region
    $region6: #{tpu_custom_call.1} parent=1 // pred_check
      _
    $region7: #{tpu_custom_call.1} parent=1 // pred_check_branch
      %11 = sbr.rel (0) target = $region9
    $region8: #{tpu_custom_call.1} parent=1 // pred_region
      _
    $region9: #{tpu_custom_call.1} parent=1 // pred_fallthru
      _
    %v12 = vld [vmem:[%s0] sm:$0xff]
    %v13 = vmul.f32 %v12, %v12
    %vm14 = vcmask 15360
    %v15 = vsel %vm14, %v13, 0.0
    %16 = vadd.xlane.f32.xlu0 %v15
    %v17 = vpop.xlane.xlu0 %16
    %v18 = vmax.f32 %v17, 1e-24
    %v19 = vrsqrt.pop %v18
    %v20 = vmul.f32 %v12, %v19
    %v21 = vld [vmem:[%s1] sm:$0x3]
    %v23 = vsel %vm14, %v20, 0
    %vm25 = vcmask 1041408
    %v27 = vsel %vm25, %v21, 0
    %29 = vmatprep.subr.mxu0 0.0
    %30 = vmatpush1.msra.mxu0 0.0
    %31 = vmatprep.subr.mxu0 0.0
    %32 = vmatpush1.msra.mxu0 0.0
    %33 = vmatprep.subr.mxu0 0.0
    %34 = vmatpush1.msra.mxu0 0.0
    %35 = vmatprep.subr.mxu0 0.0
    %36 = vmatpush1.msra.mxu0 0.0
    %37 = vmatprep.subr.mxu0 0.0
    %38 = vmatpush1.msra.mxu0 0.0
    %39 = vmatprep.subr.mxu0 0.0
    %40 = vmatpush1.msra.mxu0 0.0
    %41 = vmatprep.subr.mxu0 0.0
    %42 = vmatpush1.msra.mxu0 0.0
    %43 = vmatprep.subr.mxu0 0.0
    %44 = vmatpush1.msra.mxu0 0.0
    %45 = vmatprep.subr.mxu0 0.0
    %46 = vmatpush1.msra.mxu0 0.0
    %47 = vmatprep.subr.mxu0 0.0
    %48 = vmatpush1.msra.mxu0 0.0
    %49 = vmatprep.subr.mxu0 0.0
    %50 = vmatpush1.msra.mxu0 0.0
    %51 = vmatprep.subr.mxu0 0.0
    %52 = vmatpush1.msra.mxu0 0.0
    %53 = vmatprep.subr.mxu0 0.0
    %54 = vmatpush1.msra.mxu0 0.0
    %55 = vmatprep.subr.mxu0 0.0
    %56 = vmatpush1.msra.mxu0 0.0
    %57 = vmatprep.subr.mxu0 0.0
    %58 = vmatpush1.msra.mxu0 0.0
    %59 = vmatprep.subr.mxu0 0.0
    %60 = vmatpush1.msra.mxu0 %v27
    %61 = vmatprep.subr.mxu0 0.0
    %62 = vmatpush2.msra.mxu0 0.0
    %63 = vmatprep.subr.mxu0 0.0
    %64 = vmatpush2.msra.mxu0 0.0
    %65 = vmatprep.subr.mxu0 0.0
    %66 = vmatpush2.msra.mxu0 0.0
    %67 = vmatprep.subr.mxu0 0.0
    %68 = vmatpush2.msra.mxu0 0.0
    %69 = vmatprep.subr.mxu0 0.0
    %70 = vmatpush2.msra.mxu0 0.0
    %71 = vmatprep.subr.mxu0 0.0
    %72 = vmatpush2.msra.mxu0 0.0
    %73 = vmatprep.subr.mxu0 0.0
    %74 = vmatpush2.msra.mxu0 0.0
    %75 = vmatprep.subr.mxu0 0.0
    %76 = vmatpush2.msra.mxu0 0.0
    %77 = vmatprep.subr.mxu0 0.0
    %78 = vmatpush2.msra.mxu0 0.0
    %79 = vmatprep.subr.mxu0 0.0
    %80 = vmatpush2.msra.mxu0 0.0
    %81 = vmatprep.subr.mxu0 0.0
    %82 = vmatpush2.msra.mxu0 0.0
    %83 = vmatprep.subr.mxu0 0.0
    %84 = vmatpush2.msra.mxu0 0.0
    %85 = vmatprep.subr.mxu0 0.0
    %86 = vmatpush2.msra.mxu0 0.0
    %87 = vmatprep.subr.mxu0 0.0
    %88 = vmatpush2.msra.mxu0 0.0
    %89 = vmatprep.subr.mxu0 0.0
    %90 = vmatpush2.msra.mxu0 0.0
    %91 = vmatprep.subr.mxu0 0.0
    %92 = vmatpush2.msra.mxu0 0.0
    %93 = vmatprep.mubr.f32.mxu0 0.0
    %94 = vmatmul.mubr.f32.gmra.mxu0 %v23
    %v95 = vpop.f32.mrf.mxu0
    %v96 = vadd.f32 0.0, %v95
    %v97 = vpop.f32.mrf.mxu0
    %98 = vdwg.mxu0
    %v99 = vmul.f32 %v96, 0.1
    %v100 = vmul.f32 %v99, 10.0
    %v101 = vmul.f32 %v100, 1.442695
    %v102 = vpow.pop %v101
    %103 = vadd.xlane.f32.xlu0 %v102
    %v104 = vpop.xlane.xlu0 %103
    %v105 = vsub.f32 %v104, 118.0
    %v106 = vsub.f32 %v105, %v102
    %v107 = vmul.f32 %v99, 5.4030232
    %v108 = vmul.f32 %v99, %v99
    %v109 = vmul.f32 %v108, 0.125
    %v110 = vadd.f32 %v109, 0.5
    %v111 = vmul.f32 %v108, %v110
    %v112 = vsub.f32 1.0, %v111
    %v113 = vmul.f32 %v112, 8.41471
    %v114 = vsub.f32 %v107, %v113
    %v115 = vmul.f32 %v114, 1.442695
    %v116 = vpow.pop %v115
    %v117 = vadd.f32 %v116, %v106
    %v118 = vlog2.pop %v117
    %v119 = vmul.f32 %v118, 0.6931472
    %v120 = vsub.f32 %v114, %v119
    %121 = vst [vmem:[#allocation2] sm:$0xff] %v120
    // Predicated region
    $region10: #{tpu_custom_call.1} parent=1 // pred_check
      _
    $region11: #{tpu_custom_call.1} parent=1 // pred_check_branch
      %123 = sbr.rel (0) target = $region13
    $region12: #{tpu_custom_call.1} parent=1 // pred_region
      %s125 = ssub.s32 128, 128
      %126 = vsyncadd [#allocation3], %s125
      %s128 = sshll.u32 [#allocation2], 4
      %s129 = int_to_ptr.vmem [resolvable:$true] %s128
      %131 = dma.vmem_to_hbm [thread:$0]  %s129, 128, %s2, [#allocation3]
    $region13: #{tpu_custom_call.1} parent=1 // pred_fallthru
      _
    // Predicated region
    $region14: #{tpu_custom_call.1} parent=1 // pred_check
      _
    $region15: #{tpu_custom_call.1} parent=1 // pred_check_branch
      %133 = sbr.rel (0) target = $region17
    $region16: #{tpu_custom_call.1} parent=1 // pred_region
      %134 = dma.done [#allocation3], 128
    $region17: #{tpu_custom_call.1} parent=1 // pred_fallthru
      _
    %135 = vsyncpa [#allocation3], 1

</llo_original>
